<compile_context>
chip_gen: v7x
topology: tpu7x:2x2x1
jax: 0.10.0
libtpu: 0.0.40
codegen_flags: <defaults>
</compile_context>

<pallas_src>
import jax
import jax.numpy as jnp
from jax.experimental import pallas as pl
from jax.experimental.pallas import tpu as pltpu


def _spatial_attention_kernel(w_ref, x_ref, o_ref):
    # w_ref: SMEM (2,) f32         -> [w_avg / C, w_max]   (1/C folded on host)
    # x_ref: VMEM (bn, C, hw_tile) -> input tile, native dtype (no full f32 copy)
    # o_ref: VMEM (bn, 1, hw_tile)
    x = x_ref[...]
    # Channel sum accumulated in f32; channel max in native dtype, only the
    # (bn, 1, hw_tile) result row is cast.
    sum_c = jnp.sum(x, axis=1, keepdims=True, dtype=jnp.float32)
    max_c = jnp.max(x, axis=1, keepdims=True).astype(jnp.float32)
    y = w_ref[0] * sum_c + w_ref[1] * max_c          # 1x1 conv (2 -> 1), no bias
    o_ref[...] = jax.nn.sigmoid(y).astype(o_ref.dtype)


def _round_up(x, m):
    return ((x + m - 1) // m) * m


def _choose_blocking(N, C, HW, itemsize, target_bytes):
    """Pick (bn, hw_tile) so one input block is ~target_bytes of *padded* VMEM.

    Budgets with sublane-padded C and 128-lane-padded HW so the double-buffered
    input (2 x target) + output stays under the 16 MiB v5e scoped-VMEM default
    (v6e/v7x scoped defaults are >= 32 MiB).
    """
    sub = 8 * max(1, 4 // itemsize)              # 8 (f32) / 16 (bf16) / 32 (i8) sublanes
    c_pad = _round_up(C, sub)
    hw_full_pad = _round_up(HW, 128)
    slab_bytes = c_pad * hw_full_pad * itemsize  # one batch element, all of HW

    if slab_bytes <= target_bytes:
        # Small feature map: whole HW per step, block batch elements together.
        hw_tile = HW                                         # full-extent last dim
        bn = min(N, max(1, target_bytes // slab_bytes))
    else:
        # Large feature map: one batch element per step, tile the spatial axis.
        bn = 1
        lane_floor = _round_up(max(2048 // itemsize, 128), 128)   # >=2 KB per strided row
        hw_tile = (target_bytes // (c_pad * itemsize)) // 128 * 128
        hw_tile = max(hw_tile, 128)
        hw_tile = max(hw_tile, min(lane_floor, hw_full_pad))
        hw_tile = min(hw_tile, hw_full_pad)
        if hw_tile >= HW:
            hw_tile = HW                                     # single full-extent block
    return bn, hw_tile


def spatial_attention(x_nchw, conv_weight, *, target_block_bytes=4 << 20):
    """x_nchw: (N, C, H, W); conv_weight: (1, 2, 1, 1) as nn.Conv2d(2, 1, 1, bias=False)."""
    N, C, H, W = x_nchw.shape
    HW = H * W
    itemsize = jnp.dtype(x_nchw.dtype).itemsize

    # Fold 1/C of the channel mean into the conv weight:
    #   w0 * sum_c(x) + w1 * max_c(x)  ==  w_avg * mean_c(x) + w_max * max_c(x)
    w = conv_weight.reshape(2).astype(jnp.float32) * jnp.array(
        [1.0 / C, 1.0], dtype=jnp.float32)

    # Spatial axis on lanes, channels on sublanes. No padding / cropping.
    x = x_nchw.reshape(N, C, HW)

    bn, hw_tile = _choose_blocking(N, C, HW, itemsize, target_block_bytes)
    num_nb = pl.cdiv(N, bn)
    num_hw = pl.cdiv(HW, hw_tile)

    # Put the larger axis first so the v7x megacore split lands on it even for
    # tiny batches; both axes are fully independent ("parallel").
    if num_hw >= num_nb:
        grid = (num_hw, num_nb)
        idx_map = lambda h, n: (n, 0, h)
    else:
        grid = (num_nb, num_hw)
        idx_map = lambda n, h: (n, 0, h)

    out = pl.pallas_call(
        _spatial_attention_kernel,
        out_shape=jax.ShapeDtypeStruct((N, 1, HW), x_nchw.dtype),
        grid=grid,
        in_specs=[
            pl.BlockSpec(memory_space=pltpu.MemorySpace.SMEM),   # (2,) conv weights
            pl.BlockSpec((bn, C, hw_tile), idx_map),             # x tile
        ],
        out_specs=pl.BlockSpec((bn, 1, hw_tile), idx_map),
        compiler_params=pltpu.CompilerParams(
            dimension_semantics=("parallel", "parallel")),
    )(w, x)

    return out.reshape(N, 1, H, W)


def _reference(x_nchw, conv_weight):
    avg_out = jnp.mean(x_nchw, axis=1, keepdims=True)
    max_out = jnp.max(x_nchw, axis=1, keepdims=True)
    cat = jnp.concatenate([avg_out, max_out], axis=1)        # (N, 2, H, W)
    w = conv_weight.reshape(1, 2, 1, 1)
    y = jnp.sum(cat * w, axis=1, keepdims=True)              # 1x1 conv, no bias
    return jax.nn.sigmoid(y)


if __name__ == "__main__":
    key = jax.random.PRNGKey(0)
    kx, kw, kx2, kx3 = jax.random.split(key, 4)

    # nn.Conv2d(2, 1, kernel_size=1, bias=False) weight: (out=1, in=2, 1, 1)
    conv_w = jax.random.normal(kw, (1, 2, 1, 1), dtype=jnp.float32) * 0.5

    # Small shape consistent with the module: batch=2, channels=4, spatial=16x16.
    x = jax.random.normal(kx, (2, 4, 16, 16), dtype=jnp.float32)
    out = spatial_attention(x, conv_w)
    jax.block_until_ready(out)
    ref = _reference(x, conv_w)
    assert out.shape == (2, 1, 16, 16)
    assert jnp.allclose(out, ref, atol=1e-5, rtol=1e-5), "mismatch vs reference"

    # Non-128-multiple spatial size (7*7 = 49): full-extent ragged last-dim block.
    x2 = jax.random.normal(kx2, (2, 4, 7, 7), dtype=jnp.float32)
    out2 = spatial_attention(x2, conv_w)
    jax.block_until_ready(out2)
    ref2 = _reference(x2, conv_w)
    assert out2.shape == (2, 1, 7, 7)
    assert jnp.allclose(out2, ref2, atol=1e-5, rtol=1e-5), "mismatch (7x7 case)"

    # Force the HW-tiling path with a ragged edge block (small target bytes):
    # HW = 32*40 = 1280, hw_tile = 512 -> 3 HW blocks, last one masked.
    x3 = jax.random.normal(kx3, (2, 8, 32, 40), dtype=jnp.float32)
    out3 = spatial_attention(x3, conv_w, target_block_bytes=16 * 1024)
    jax.block_until_ready(out3)
    ref3 = _reference(x3, conv_w)
    assert out3.shape == (2, 1, 32, 40)
    assert jnp.allclose(out3, ref3, atol=1e-5, rtol=1e-5), "mismatch (ragged tiles)"

    print("KERNEL_OK")
</pallas_src>

<mosaic_0001>
module attributes {stable_mosaic.version = 11 : i64} {
  func.func @_spatial_attention_kernel(%arg0: i32, %arg1: i32, %arg2: memref<2xf32, #tpu.memory_space<smem>>, %arg3: memref<2x4x256xf32, #tpu.memory_space<vmem>>, %arg4: memref<2x1x256xf32, #tpu.memory_space<vmem>>) attributes {dimension_semantics = [#tpu.dimension_semantics<parallel>, #tpu.dimension_semantics<parallel>], iteration_bounds = array<i64: 1, 1>, scalar_prefetch = 0 : i64, scratch_operands = 0 : i64, tpu.core_type = #tpu.core_type<tc>, window_params = [{transform_indices = @transform_0, window_bounds = array<i64: 2>}, {transform_indices = @transform_1, window_bounds = array<i64: 2, 4, 256>}, {transform_indices = @transform_2, window_bounds = array<i64: 2, 1, 256>}]} {
    %c0 = arith.constant 0 : index
    %c0_0 = arith.constant 0 : index
    %c0_1 = arith.constant 0 : index
    %0 = vector.load %arg3[%c0, %c0_0, %c0_1] : memref<2x4x256xf32, #tpu.memory_space<vmem>>, vector<2x4x256xf32>
    %cst = arith.constant dense<0.000000e+00> : vector<2x256xf32>
    %1 = vector.multi_reduction <add>, %0, %cst [1] : vector<2x4x256xf32> to vector<2x256xf32>
    %2 = vector.shape_cast %1 : vector<2x256xf32> to vector<2x1x256xf32>
    %cst_2 = arith.constant dense<0xFF800000> : vector<2x256xf32>
    %3 = vector.multi_reduction <maximumf>, %0, %cst_2 [1] : vector<2x4x256xf32> to vector<2x256xf32>
    %4 = vector.shape_cast %3 : vector<2x256xf32> to vector<2x1x256xf32>
    %c0_3 = arith.constant 0 : index
    %5 = memref.load %arg2[%c0_3] : memref<2xf32, #tpu.memory_space<smem>>
    %6 = vector.broadcast %5 : f32 to vector<2x1x256xf32>
    %7 = arith.mulf %6, %2 : vector<2x1x256xf32>
    %c1 = arith.constant 1 : index
    %8 = memref.load %arg2[%c1] : memref<2xf32, #tpu.memory_space<smem>>
    %9 = vector.broadcast %8 : f32 to vector<2x1x256xf32>
    %10 = arith.mulf %9, %4 : vector<2x1x256xf32>
    %11 = arith.addf %7, %10 : vector<2x1x256xf32>
    %12 = arith.negf %11 : vector<2x1x256xf32>
    %13 = math.exp %12 : vector<2x1x256xf32>
    %cst_4 = arith.constant 1.000000e+00 : f32
    %14 = vector.broadcast %cst_4 : f32 to vector<2x1x256xf32>
    %15 = arith.addf %14, %13 : vector<2x1x256xf32>
    %16 = arith.divf %14, %15 : vector<2x1x256xf32>
    %c0_5 = arith.constant 0 : index
    %c0_6 = arith.constant 0 : index
    %c0_7 = arith.constant 0 : index
    %17 = vector.load %arg4[%c0_5, %c0_6, %c0_7] : memref<2x1x256xf32, #tpu.memory_space<vmem>>, vector<2x1x256xf32>
    tpu.vector_store %arg4[%c0_5, %c0_6, %c0_7], %16 {strides = array<i32>} : memref<2x1x256xf32, #tpu.memory_space<vmem>>, vector<2x1x256xf32>,
    return
  }
  func.func @transform_0(%arg0: i32, %arg1: i32) -> i32 {
    %c0_i32 = arith.constant 0 : i32
    %c0_i32_0 = arith.constant 0 : i32
    return %c0_i32 : i32
  }
  func.func @transform_1(%arg0: i32, %arg1: i32) -> (i32, i32, i32) {
    %c0_i32 = arith.constant 0 : i32
    %c0_i32_0 = arith.constant 0 : i32
    return %arg1, %c0_i32, %arg0 : i32, i32, i32
  }
  func.func @transform_2(%arg0: i32, %arg1: i32) -> (i32, i32, i32) {
    %c0_i32 = arith.constant 0 : i32
    %c0_i32_0 = arith.constant 0 : i32
    return %arg1, %c0_i32, %arg0 : i32, i32, i32
  }
}

</mosaic_0001>

<llo_original>
// kernel: tpu_custom_call.1
$region0: #{tpu_custom_call.1}
  #allocation0 [shape = 'u32[]', space=smem, size = 0x4, offset = 0x4, fixed_abs, tag = 'smem constant byte address 0x4 - core index']
  #allocation1 [shape = 'u32[144,128]{1,0:T(1,128)}', space=vmem, size = 0x12000, scoped, tag = 'internal scratch']
  %s0 = inlined_call_operand.hbm [shape: f32[2], index: 0, kind: input, shape index: {}]
  %s1 = inlined_call_operand.hbm [shape: f32[2,4,256], index: 1, kind: input, shape index: {}]
  %s2 = inlined_call_operand.hbm [shape: f32[2,1,256], index: 2, kind: output, shape index: {}]
  %s3 = sld [smem:[#allocation0]]
  $region26: #{tpu_custom_call.1} parent=0
    _
  %s5 = ssub.s32 1, %s3
  %s6 = scalar_select 0, %s5, %s3
  $region1: #{tpu_custom_call.1} parent=0
    #allocation2 [shape = 'u8[512]{0}', space=smem, size = 0x200, scoped, tag = 'input window, operand 0, single buffered']
    #allocation3 [shape = 's32[1]{0}', space=sflag, size = 0x4, scoped, tag = 'scoped memory for tpu_custom_call.1']
    #allocation4 [shape = 's32[1]{0}', space=sflag, size = 0x4, scoped, tag = 'scoped memory for tpu_custom_call.1']
    #allocation5 [shape = 's32[1]{0}', space=sflag, size = 0x4, scoped, tag = 'scoped memory for tpu_custom_call.1']
    #allocation6 [shape = 'u8[8192]{0}', space=vmem, size = 0x2000, scoped, tag = 'input window, operand 1, single buffered']
    #allocation7 [shape = 'u8[2048]{0}', space=vmem, size = 0x800, scoped, tag = 'output window, operand 0, single buffered']
    %7 = vsyncpa [#allocation5], 0
    %8 = vsyncpa [#allocation3], 0
    %9 = vsyncpa [#allocation4], 0
    // Predicated region
    $region2: #{tpu_custom_call.1} parent=1 // pred_check
      _
    $region3: #{tpu_custom_call.1} parent=1 // pred_check_branch
      %11 = sbr.rel (0) target = $region5
    $region4: #{tpu_custom_call.1} parent=1 // pred_region
      %s13 = ssub.s32 16, 16
      %14 = vsyncadd [#allocation5], %s13
      %17 = dma.hbm_to_smem %s0, 16, [#allocation2], [#allocation5]
    $region5: #{tpu_custom_call.1} parent=1 // pred_fallthru
      _
    // Predicated region
    $region6: #{tpu_custom_call.1} parent=1 // pred_check
      _
    $region7: #{tpu_custom_call.1} parent=1 // pred_check_branch
      %19 = sbr.rel (0) target = $region9
    $region8: #{tpu_custom_call.1} parent=1 // pred_region
      %s21 = ssub.s32 256, 256
      %22 = vsyncadd [#allocation3], %s21
      %s23 = sshll.u32 [#allocation6], 4
      %s24 = int_to_ptr.vmem [resolvable:$true] %s23
      %29 = dma.hbm_to_vmem [thread:$0]  %s1, 256, %s24, [#allocation3], 128, 128, 8
    $region9: #{tpu_custom_call.1} parent=1 // pred_fallthru
      _
    // Predicated region
    $region10: #{tpu_custom_call.1} parent=1 // pred_check
      _
    $region11: #{tpu_custom_call.1} parent=1 // pred_check_branch
      %31 = sbr.rel (0) target = $region13
    $region12: #{tpu_custom_call.1} parent=1 // pred_region
      %32 = dma.done [#allocation5], 16
    $region13: #{tpu_custom_call.1} parent=1 // pred_fallthru
      _
    // Predicated region
    $region14: #{tpu_custom_call.1} parent=1 // pred_check
      _
    $region15: #{tpu_custom_call.1} parent=1 // pred_check_branch
      %34 = sbr.rel (0) target = $region17
    $region16: #{tpu_custom_call.1} parent=1 // pred_region
      %35 = dma.done [#allocation3], 256
    $region17: #{tpu_custom_call.1} parent=1 // pred_fallthru
      _
    %36 = sfence
    %v37 = vld [vmem:[#allocation6] sm:$0xff]
    %v38 = vld [vmem:[#allocation6 + $0x8] sm:$0xff]
    %v41 = vcombine.high %v37, %v37
    %v42 = vcombine.high %v38, %v38
    %vm45 = vcmask 1043456
    %v46 = vsel %vm45, %v37, 0.0
    %v47 = vrot.slane %v46, 4
    %v48 = vadd.f32 %v46, %v47
    %v49 = vrot.slane %v48, 2
    %v50 = vadd.f32 %v48, %v49
    %v51 = vrot.slane %v50, 1
    %v52 = vadd.f32 %v50, %v51
    %v53 = vsel %vm45, %v41, 0.0
    %v54 = vrot.slane %v53, 4
    %v55 = vadd.f32 %v53, %v54
    %v56 = vrot.slane %v55, 2
    %v57 = vadd.f32 %v55, %v56
    %v58 = vrot.slane %v57, 1
    %v59 = vadd.f32 %v57, %v58
    %v60 = vsel %vm45, %v38, 0.0
    %v61 = vrot.slane %v60, 4
    %v62 = vadd.f32 %v60, %v61
    %v63 = vrot.slane %v62, 2
    %v64 = vadd.f32 %v62, %v63
    %v65 = vrot.slane %v64, 1
    %v66 = vadd.f32 %v64, %v65
    %v67 = vsel %vm45, %v42, 0.0
    %v68 = vrot.slane %v67, 4
    %v69 = vadd.f32 %v67, %v68
    %v70 = vrot.slane %v69, 2
    %v71 = vadd.f32 %v69, %v70
    %v72 = vrot.slane %v71, 1
    %v73 = vadd.f32 %v71, %v72
    %v74 = vsel %vm45, %v37, -inf
    %v75 = vrot.slane %v74, 4
    %v76 = vmax.f32 %v74, %v75
    %v77 = vrot.slane %v76, 2
    %v78 = vmax.f32 %v76, %v77
    %v79 = vrot.slane %v78, 1
    %v80 = vmax.f32 %v78, %v79
    %v81 = vsel %vm45, %v41, -inf
    %v82 = vrot.slane %v81, 4
    %v83 = vmax.f32 %v81, %v82
    %v84 = vrot.slane %v83, 2
    %v85 = vmax.f32 %v83, %v84
    %v86 = vrot.slane %v85, 1
    %v87 = vmax.f32 %v85, %v86
    %v88 = vsel %vm45, %v38, -inf
    %v89 = vrot.slane %v88, 4
    %v90 = vmax.f32 %v88, %v89
    %v91 = vrot.slane %v90, 2
    %v92 = vmax.f32 %v90, %v91
    %v93 = vrot.slane %v92, 1
    %v94 = vmax.f32 %v92, %v93
    %v95 = vsel %vm45, %v42, -inf
    %v96 = vrot.slane %v95, 4
    %v97 = vmax.f32 %v95, %v96
    %v98 = vrot.slane %v97, 2
    %v99 = vmax.f32 %v97, %v98
    %v100 = vrot.slane %v99, 1
    %v101 = vmax.f32 %v99, %v100
    %s102 = sld [smem:[#allocation2]]
    %v103 = vstv %s102
    %v104 = vmul.f32 %v103, %v52
    %v105 = vmul.f32 %v103, %v59
    %v106 = vmul.f32 %v103, %v66
    %v107 = vmul.f32 %v103, %v73
    %s108 = sld [smem:[#allocation2 + $0x1]]
    %v109 = vstv %s108
    %v110 = vmul.f32 %v109, %v80
    %v111 = vmul.f32 %v109, %v87
    %v112 = vmul.f32 %v109, %v94
    %v113 = vmul.f32 %v109, %v101
    %v114 = vadd.f32 %v104, %v110
    %v115 = vadd.f32 %v105, %v111
    %v116 = vadd.f32 %v106, %v112
    %v117 = vadd.f32 %v107, %v113
    %v118 = vxor.u32 %v114, 2147483648
    %v119 = vxor.u32 %v115, 2147483648
    %v120 = vxor.u32 %v116, 2147483648
    %v121 = vxor.u32 %v117, 2147483648
    %v122 = vmul.f32 %v118, 1.442695
    %v123 = vpow.pop %v122
    %v124 = vmul.f32 %v119, 1.442695
    %v125 = vpow.pop %v124
    %v126 = vmul.f32 %v120, 1.442695
    %v127 = vpow.pop %v126
    %v128 = vmul.f32 %v121, 1.442695
    %v129 = vpow.pop %v128
    %v130 = vadd.f32 %v123, 1.0
    %v131 = vadd.f32 %v125, 1.0
    %v132 = vadd.f32 %v127, 1.0
    %v133 = vadd.f32 %v129, 1.0
    %v134 = vrcp.pop %v130
    %v135 = vmul.f32 1.0, %v134
    %v136 = vrcp.pop %v131
    %v137 = vmul.f32 1.0, %v136
    %v138 = vrcp.pop %v132
    %v139 = vmul.f32 1.0, %v138
    %v140 = vrcp.pop %v133
    %v141 = vmul.f32 1.0, %v140
    %v146 = vcombine.low %v135, %v137
    %v148 = vunpack.c.l.s4 1966171168
    %v149 = vunpack.c.0.s8 %v148
    %v150 = vlaneseq
    %v151 = vshrl.u32 %v150, 7
    %v152 = vsub.s32 %v149, %v151
    %v153 = vrot.slane %v146, %v152
    %v155 = vunpack.c.l.s4 1966171168
    %v156 = vunpack.c.0.s8 %v155
    %v157 = vlaneseq
    %v158 = vshrl.u32 %v157, 7
    %v159 = vsub.s32 %v156, %v158
    %v160 = vrot.slane %v153, %v159
    %v161 = vcombine.low %v139, %v141
    %v163 = vunpack.c.l.s4 1966171168
    %v164 = vunpack.c.0.s8 %v163
    %v165 = vlaneseq
    %v166 = vshrl.u32 %v165, 7
    %v167 = vsub.s32 %v164, %v166
    %v168 = vrot.slane %v161, %v167
    %v170 = vunpack.c.l.s4 1966171168
    %v171 = vunpack.c.0.s8 %v170
    %v172 = vlaneseq
    %v173 = vshrl.u32 %v172, 7
    %v174 = vsub.s32 %v171, %v173
    %v175 = vrot.slane %v168, %v174
    %v178 = vlaneseq
    %vm179 = vcmp.ge.s32.totalorder %v178, 0
    %vm180 = vcmp.lt.s32.totalorder %v178, 256
    %vm181 = vmand %vm179, %vm180
    %182 = vst.msk [vmem:[#allocation7] sm:$0x3] %vm181, %v160
    %183 = vst.msk [vmem:[#allocation7 + $0x2] sm:$0x3] %vm181, %v175
    // Predicated region
    $region18: #{tpu_custom_call.1} parent=1 // pred_check
      _
    $region19: #{tpu_custom_call.1} parent=1 // pred_check_branch
      %185 = sbr.rel (0) target = $region21
    $region20: #{tpu_custom_call.1} parent=1 // pred_region
      %s187 = ssub.s32 64, 64
      %188 = vsyncadd [#allocation4], %s187
      %s189 = sshll.u32 [#allocation7], 4
      %s190 = int_to_ptr.vmem [resolvable:$true] %s189
      %195 = dma.vmem_to_hbm [thread:$0]  %s190, 64, %s2, [#allocation4], 32, 32, 2
    $region21: #{tpu_custom_call.1} parent=1 // pred_fallthru
      _
    // Predicated region
    $region22: #{tpu_custom_call.1} parent=1 // pred_check
      _
    $region23: #{tpu_custom_call.1} parent=1 // pred_check_branch
      %197 = sbr.rel (0) target = $region25
    $region24: #{tpu_custom_call.1} parent=1 // pred_region
      %198 = dma.done [#allocation4], 64
    $region25: #{tpu_custom_call.1} parent=1 // pred_fallthru
      _
    %199 = vsyncpa [#allocation3], 1
    %200 = vsyncpa [#allocation4], 1
    %201 = vsyncpa [#allocation5], 1

</llo_original>
